<compile_context>
chip_gen: v6e
topology: v6e:2x2x1
jax: 0.10.0
libtpu: 0.0.40
codegen_flags: <defaults>
</compile_context>

<pallas_src>
import functools

import jax
import jax.numpy as jnp
from jax.experimental import pallas as pl
from jax.experimental.pallas import tpu as pltpu


# ----------------------------------------------------------------------------
# Tiling / compiler-param helpers
# ----------------------------------------------------------------------------
_TM_MAX = 2048          # M-tile upper bound (sweepable; blocks stay tiny at 48-256 channels)
_SINGLE_TILE_MAX = 1024  # below this, a single grid step is fine (nothing to overlap/shard)


def _pick_tm(m, tm_max=_TM_MAX):
    """Pick the M tile.

    * small m -> one tile.
    * large m -> >= 2 tiles (v7x megacore sharding + DMA/compute overlap), preferring an
      even tile count; tiles are multiples of 8 that divide m, so no pad/slice pass.
    """
    if m <= _SINGLE_TILE_MAX:
        return m, m
    upper = (min(tm_max, m // 2) // 8) * 8
    if upper >= 8:
        for want_even in (True, False):
            for cand in range(upper, 7, -8):
                if m % cand == 0 and (not want_even or (m // cand) % 2 == 0):
                    return cand, m
    # Fallback (never hit for the /4,/8,/16 stride hierarchy): pad M to a tile multiple.
    tm = max(upper, 8)
    m_pad = ((m + tm - 1) // tm) * tm
    return tm, m_pad


def _mosaic_params(vmem_estimate_bytes):
    # ~2x the double-buffered footprint, floored at 32 MiB, capped at 48 MiB so compiler
    # scratch / slack still fits under v7x's 64 MiB physical VMEM.
    limit = int(min(max(2 * vmem_estimate_bytes, 32 << 20), 48 << 20))
    return pltpu.CompilerParams(
        dimension_semantics=("parallel",),
        vmem_limit_bytes=limit,
    )


def _flatten_m(x_nhwc, m_pad, dtype=jnp.bfloat16):
    n, h, w, c = x_nhwc.shape
    m = n * h * w
    xf = x_nhwc.reshape(m, c).astype(dtype)  # no-op cast when already bf16
    if m_pad != m:
        xf = jnp.pad(xf, ((0, m_pad - m), (0, 0)))
    return xf


# ----------------------------------------------------------------------------
# Pallas kernels
# ----------------------------------------------------------------------------
def _double_pw_kernel(x_ref, w1_ref, b1_ref, w2_ref, b2_ref, o_ref):
    # Two chained 1x1 conv+BN+ReLU blocks; the 80-ch intermediate stays on-chip.
    h = jnp.dot(x_ref[...], w1_ref[...], preferred_element_type=jnp.float32)
    h = jnp.maximum(h + b1_ref[...], 0.0)
    acc = jnp.dot(h.astype(w2_ref.dtype), w2_ref[...], preferred_element_type=jnp.float32)
    o_ref[...] = jnp.maximum(acc + b2_ref[...], 0.0).astype(o_ref.dtype)


def _fused_head_kernel(low_ref, midu_ref, x2_ref, x1u_ref,
                       wsc_ref, bsc_ref, wa_ref, wb_ref, bias_ref, o_ref):
    # low48 = ReLU(low @ Wsc + bsc) computed on-chip (shortcut_conv2 fused, never in HBM),
    # then: fused = concat([low48, x2], -1) + concat([mid_up, x1_up], -1); out = fused @ W + bias,
    # as two partial matmuls (W row-split 48 / 256) so no 304-ch tensor ever exists.
    low48 = jnp.dot(low_ref[...], wsc_ref[...], preferred_element_type=jnp.float32)
    low48 = jnp.maximum(low48 + bsc_ref[...], 0.0)
    a = (low48 + midu_ref[...].astype(jnp.float32)).astype(wa_ref.dtype)
    b = (x2_ref[...].astype(jnp.float32) + x1u_ref[...].astype(jnp.float32)).astype(wb_ref.dtype)
    acc = jnp.dot(a, wa_ref[...], preferred_element_type=jnp.float32)
    acc = acc + jnp.dot(b, wb_ref[...], preferred_element_type=jnp.float32)
    o_ref[...] = (acc + bias_ref[...]).astype(o_ref.dtype)


# ----------------------------------------------------------------------------
# Pallas wrappers
# ----------------------------------------------------------------------------
def double_pointwise_conv_bn(x_nhwc, w1, b1, w2, b2, tm_max=_TM_MAX):
    """Two chained 1x1 conv+BN+ReLU blocks fused in one kernel. bf16 in / bf16 out."""
    n, h, wd, cin = x_nhwc.shape
    cmid = w1.shape[1]
    cout = w2.shape[1]
    m = n * h * wd
    tm, m_pad = _pick_tm(m, tm_max)
    xf = _flatten_m(x_nhwc, m_pad)
    est = (2 * tm * cin * 2 + (cin * cmid + cmid * cout) * 2
           + 2 * tm * cout * 2                      # bf16 output, double-buffered
           + tm * cmid * 4 + tm * cout * 4)         # on-chip f32 intermediates

    out = pl.pallas_call(
        _double_pw_kernel,
        out_shape=jax.ShapeDtypeStruct((m_pad, cout), jnp.bfloat16),
        grid=(m_pad // tm,),
        in_specs=[
            pl.BlockSpec((tm, cin), lambda i: (i, 0)),
            pl.BlockSpec((cin, cmid), lambda i: (0, 0)),
            pl.BlockSpec((1, cmid), lambda i: (0, 0)),
            pl.BlockSpec((cmid, cout), lambda i: (0, 0)),
            pl.BlockSpec((1, cout), lambda i: (0, 0)),
        ],
        out_specs=pl.BlockSpec((tm, cout), lambda i: (i, 0)),
        compiler_params=_mosaic_params(est),
    )(xf, w1, b1, w2, b2)
    if m_pad != m:
        out = out[:m]
    return out.reshape(n, h, wd, cout)


def fused_concat_add_head(low, mid_up, x2, x1_up, wsc, bsc, wa, wb, bias,
                          num_classes, tm_max=_TM_MAX):
    """shortcut_conv2 + (concat + add) + 1x1 head, all fused. bf16 in / bf16 out (lane-padded)."""
    n, h, wd, c_low = low.shape
    ca = wa.shape[0]        # 48
    cb = wb.shape[0]        # 256
    cp = wa.shape[1]        # lane-padded output channels (multiple of 128)
    m = n * h * wd
    tm, m_pad = _pick_tm(m, tm_max)
    lowf = _flatten_m(low, m_pad)
    midf = _flatten_m(mid_up, m_pad)
    x2f = _flatten_m(x2, m_pad)
    x1f = _flatten_m(x1_up, m_pad)
    est = (2 * tm * (c_low + ca + 2 * cb) * 2
           + (c_low * ca + ca * cp + cb * cp) * 2
           + 2 * tm * cp * 2                         # bf16 output, double-buffered
           + tm * (ca + cb + cp) * 4)                # on-chip f32 intermediates

    out = pl.pallas_call(
        _fused_head_kernel,
        out_shape=jax.ShapeDtypeStruct((m_pad, cp), jnp.bfloat16),
        grid=(m_pad // tm,),
        in_specs=[
            pl.BlockSpec((tm, c_low), lambda i: (i, 0)),
            pl.BlockSpec((tm, ca), lambda i: (i, 0)),
            pl.BlockSpec((tm, cb), lambda i: (i, 0)),
            pl.BlockSpec((tm, cb), lambda i: (i, 0)),
            pl.BlockSpec((c_low, ca), lambda i: (0, 0)),
            pl.BlockSpec((1, ca), lambda i: (0, 0)),
            pl.BlockSpec((ca, cp), lambda i: (0, 0)),
            pl.BlockSpec((cb, cp), lambda i: (0, 0)),
            pl.BlockSpec((1, cp), lambda i: (0, 0)),
        ],
        out_specs=pl.BlockSpec((tm, cp), lambda i: (i, 0)),
        compiler_params=_mosaic_params(est),
    )(lowf, midf, x2f, x1f, wsc, bsc, wa, wb, bias)
    if m_pad != m:
        out = out[:m]
    return out.reshape(n, h, wd, cp)[..., :num_classes]


# ----------------------------------------------------------------------------
# Glue: bilinear resize (align_corners=True) in matmul form, avg-pool, XLA stem
# ----------------------------------------------------------------------------
def _interp_matrix(in_size, out_size):
    """(out_size, in_size) align_corners=True bilinear interpolation matrix (f32)."""
    pos = jnp.linspace(0.0, float(in_size - 1), out_size)
    lo = jnp.clip(jnp.floor(pos).astype(jnp.int32), 0, in_size - 1)
    hi = jnp.clip(lo + 1, 0, in_size - 1)
    frac = (pos - lo.astype(jnp.float32))[:, None]
    return (jax.nn.one_hot(lo, in_size, dtype=jnp.float32) * (1.0 - frac)
            + jax.nn.one_hot(hi, in_size, dtype=jnp.float32) * frac)


def _apply_resize(x, rh, rw, out_dtype):
    """Separable bilinear resize as two small matmuls (MXU) instead of XLA gathers."""
    y = jnp.einsum("oh,nhwc->nowc", rh, x, preferred_element_type=jnp.float32)
    y = jnp.einsum("pw,nowc->nopc", rw, y, preferred_element_type=jnp.float32)
    return y.astype(out_dtype)


def resize_bilinear_align_corners(x, out_h, out_w, out_dtype=None):
    n, h, w, c = x.shape
    out_dtype = out_dtype or x.dtype
    if (h, w) == (out_h, out_w):
        return x.astype(out_dtype)
    return _apply_resize(x, _interp_matrix(h, out_h), _interp_matrix(w, out_w), out_dtype)


def avg_pool(x, k):
    n, h, w, c = x.shape
    return x.reshape(n, h // k, k, w // k, k, c).mean(axis=(2, 4))


def stem_conv_bn(x_nhwc, w, bias):
    # cin=3 stand-in stem stays in XLA: a K=3 Pallas matmul wastes 125/128 lanes per vreg.
    y = jnp.einsum("nhwc,cd->nhwd", x_nhwc.astype(jnp.bfloat16), w,
                   preferred_element_type=jnp.float32) + bias
    return jax.nn.relu(y).astype(jnp.bfloat16)


# ----------------------------------------------------------------------------
# Deterministic parameter construction (1x1 Conv + eval-mode BatchNorm folded into W / bias).
# Weights stored bf16, biases stored (1, cout) f32 -- no per-forward casts/reshapes.
# ----------------------------------------------------------------------------
def make_pw_params(key, cin, cout, cout_pad=None):
    kw, kb, kg, kbe = jax.random.split(key, 4)
    w = jax.random.normal(kw, (cin, cout), jnp.float32) * (1.0 / jnp.sqrt(float(cin)))
    conv_b = jax.random.normal(kb, (cout,), jnp.float32) * 0.01
    gamma = 1.0 + 0.1 * jax.random.normal(kg, (cout,), jnp.float32)
    beta = 0.1 * jax.random.normal(kbe, (cout,), jnp.float32)
    mean = jnp.zeros((cout,), jnp.float32)
    var = jnp.ones((cout,), jnp.float32)
    eps = 1e-5
    scale = gamma / jnp.sqrt(var + eps)
    w_folded = w * scale[None, :]          # exact for eval-mode BN
    bias = beta + scale * (conv_b - mean)
    if cout_pad is not None and cout_pad > cout:
        w_folded = jnp.pad(w_folded, ((0, 0), (0, cout_pad - cout)))
        bias = jnp.pad(bias, ((0, cout_pad - cout),))
    cfin = w_folded.shape[1]
    return w_folded.astype(jnp.bfloat16), bias.reshape(1, cfin).astype(jnp.float32)


def build_rain_params(key, num_classes=2):
    ks = jax.random.split(key, 8)
    in_channels, mid_feat, low_ch = 256, 40, 24
    head_ca = 48
    # Lane-padded head output (lane-dense stores); output is bf16 and sliced outside.
    # TODO(synk): benchmark cp=128-bf16 vs unpadded cp=num_classes writeback.
    cout_pad = max(128, ((num_classes + 127) // 128) * 128)
    w_head, b_head = make_pw_params(ks[6], head_ca + in_channels, num_classes, cout_pad=cout_pad)
    return {
        # TODO(synk): MEbackbone.forward is empty in the reference; deterministic XLA stand-in heads.
        "bb_low": make_pw_params(ks[0], 3, low_ch),
        "bb_mid": make_pw_params(ks[1], 3, mid_feat),
        "bb_deep": make_pw_params(ks[2], 3, in_channels),
        "shortcut_conv1": make_pw_params(ks[3], mid_feat, 80),
        "shortcut_conv1_1": make_pw_params(ks[4], 80, 48),
        "shortcut_conv2": make_pw_params(ks[5], low_ch, 48),
        # TODO(synk): MFM definition not provided; placeholder fusion head (1x1 conv -> num_classes),
        # stored row-split (48 / 256) with the output dim lane-padded to 128.
        "bga_wa": w_head[:head_ca],
        "bga_wb": w_head[head_ca:],
        "bga_bias": b_head,
    }


# ----------------------------------------------------------------------------
# Rain.forward
# ----------------------------------------------------------------------------
def rain_forward(x_nchw, params, num_classes=2):
    H, W = x_nchw.shape[2], x_nchw.shape[3]
    x = jnp.transpose(x_nchw, (0, 2, 3, 1)).astype(jnp.float32)  # NCHW -> NHWC

    # --- backbone stand-in: hierarchical pools (full-res input read once), bf16 features ---
    p4 = avg_pool(x, 4)
    p8 = avg_pool(p4, 2)
    p16 = avg_pool(p8, 2)
    low = stem_conv_bn(p4, *params["bb_low"])     # (N, H/4,  W/4,  24)
    mid = stem_conv_bn(p8, *params["bb_mid"])     # (N, H/8,  W/8,  40)
    deep = stem_conv_bn(p16, *params["bb_deep"])  # (N, H/16, W/16, 256)

    # TODO(synk): AMACA (aspp) definition not provided; identity pass-through (dim_in == dim_out == 256).
    xx = deep
    # TODO(synk): PolarizedSelfAttention (att2/att3) definitions not provided; identity pass-through.

    # Pallas: shortcut_conv1 (40->80) + shortcut_conv1_1 (80->48) fused, 80-ch stays on-chip.
    mid48 = double_pointwise_conv_bn(mid, *params["shortcut_conv1"], *params["shortcut_conv1_1"])

    h4, w4 = low.shape[1], low.shape[2]
    h8, w8 = mid48.shape[1], mid48.shape[2]
    h16, w16 = xx.shape[1], xx.shape[2]

    # Bilinear resizes (align_corners=True) in matmul form, outputs in bf16 (feed the head).
    x2 = resize_bilinear_align_corners(xx, h4, w4, out_dtype=jnp.bfloat16)       # (N,H/4,W/4,256)
    mid_up = resize_bilinear_align_corners(mid48, h4, w4, out_dtype=jnp.bfloat16)  # (N,H/4,W/4,48)
    # x1_up = resize(resize(xx, h8, w8), h4, w4): composed interpolation matrices are exactly
    # equivalent (linear op) and the H/8 x 256-ch intermediate x1 never hits HBM.
    rh_comp = _interp_matrix(h8, h4) @ _interp_matrix(h16, h8)
    rw_comp = _interp_matrix(w8, w4) @ _interp_matrix(w16, w8)
    x1_up = _apply_resize(xx, rh_comp, rw_comp, jnp.bfloat16)                     # (N,H/4,W/4,256)

    # TODO(synk): MFM (bga) definition not provided; placeholder = upsample x_s, add to x_d,
    # 1x1 conv head -- shortcut_conv2 + concat + add + head fused into one Pallas kernel
    # (neither low48 nor the 304-ch tensors ever exist in HBM).
    out = fused_concat_add_head(low, mid_up, x2, x1_up,
                                *params["shortcut_conv2"],
                                params["bga_wa"], params["bga_wb"], params["bga_bias"],
                                num_classes)

    out = resize_bilinear_align_corners(out, H, W, out_dtype=jnp.float32)
    return jnp.transpose(out, (0, 3, 1, 2))  # back to NCHW


if __name__ == "__main__":
    key = jax.random.PRNGKey(0)
    k_param, k_x = jax.random.split(key)

    num_classes = 2
    params = build_rain_params(k_param, num_classes=num_classes)

    # Small input consistent with the module's stride hierarchy (/4, /8, /16).
    x = jax.random.normal(k_x, (2, 3, 32, 32), jnp.float32)

    fwd = jax.jit(functools.partial(rain_forward, params=params, num_classes=num_classes))
    y = fwd(x)
    jax.block_until_ready(y)

    assert y.shape == (2, num_classes, 32, 32), y.shape
    print("KERNEL_OK")
</pallas_src>

<mosaic_0001>
module attributes {stable_mosaic.version = 11 : i64} {
  func.func @_double_pw_kernel(%arg0: i32, %arg1: memref<32x40xbf16, #tpu.memory_space<vmem>>, %arg2: memref<40x80xbf16, #tpu.memory_space<vmem>>, %arg3: memref<1x80xf32, #tpu.memory_space<vmem>>, %arg4: memref<80x48xbf16, #tpu.memory_space<vmem>>, %arg5: memref<1x48xf32, #tpu.memory_space<vmem>>, %arg6: memref<32x48xbf16, #tpu.memory_space<vmem>>) attributes {dimension_semantics = [#tpu.dimension_semantics<parallel>], iteration_bounds = array<i64: 1>, scalar_prefetch = 0 : i64, scratch_operands = 0 : i64, tpu.core_type = #tpu.core_type<tc>, window_params = [{transform_indices = @transform_0, window_bounds = array<i64: 32, 40>}, {pipeline_mode = #tpu.pipeline_mode<synchronous>, transform_indices = @transform_1, window_bounds = array<i64: 40, 80>}, {pipeline_mode = #tpu.pipeline_mode<synchronous>, transform_indices = @transform_2, window_bounds = array<i64: 1, 80>}, {pipeline_mode = #tpu.pipeline_mode<synchronous>, transform_indices = @transform_3, window_bounds = array<i64: 80, 48>}, {pipeline_mode = #tpu.pipeline_mode<synchronous>, transform_indices = @transform_4, window_bounds = array<i64: 1, 48>}, {transform_indices = @transform_5, window_bounds = array<i64: 32, 48>}]} {
    %c0 = arith.constant 0 : index
    %c0_0 = arith.constant 0 : index
    %0 = vector.load %arg1[%c0, %c0_0] : memref<32x40xbf16, #tpu.memory_space<vmem>>, vector<32x40xbf16>
    %c0_1 = arith.constant 0 : index
    %c0_2 = arith.constant 0 : index
    %1 = vector.load %arg2[%c0_1, %c0_2] : memref<40x80xbf16, #tpu.memory_space<vmem>>, vector<40x80xbf16>
    %cst = arith.constant dense<0.000000e+00> : vector<32x80xf32>
    %2 = tpu.matmul %0, %1, %cst {dimension_numbers = #tpu.dot_dimension_numbers<[1], [0], [0], [1], [0, 0, 1, 1], [], []>} : vector<32x40xbf16>, vector<40x80xbf16>, vector<32x80xf32> -> vector<32x80xf32>
    %c0_3 = arith.constant 0 : index
    %c0_4 = arith.constant 0 : index
    %3 = vector.load %arg3[%c0_3, %c0_4] : memref<1x80xf32, #tpu.memory_space<vmem>>, vector<1x80xf32>
    %4 = vector.broadcast %3 : vector<1x80xf32> to vector<32x80xf32>
    %5 = arith.addf %2, %4 : vector<32x80xf32>
    %cst_5 = arith.constant 0.000000e+00 : f32
    %6 = vector.broadcast %cst_5 : f32 to vector<32x80xf32>
    %7 = arith.maximumf %5, %6 : vector<32x80xf32>
    %8 = arith.truncf %7 : vector<32x80xf32> to vector<32x80xbf16>
    %c0_6 = arith.constant 0 : index
    %c0_7 = arith.constant 0 : index
    %9 = vector.load %arg4[%c0_6, %c0_7] : memref<80x48xbf16, #tpu.memory_space<vmem>>, vector<80x48xbf16>
    %cst_8 = arith.constant dense<0.000000e+00> : vector<32x48xf32>
    %10 = tpu.matmul %8, %9, %cst_8 {dimension_numbers = #tpu.dot_dimension_numbers<[1], [0], [0], [1], [0, 0, 1, 1], [], []>} : vector<32x80xbf16>, vector<80x48xbf16>, vector<32x48xf32> -> vector<32x48xf32>
    %c0_9 = arith.constant 0 : index
    %c0_10 = arith.constant 0 : index
    %11 = vector.load %arg5[%c0_9, %c0_10] : memref<1x48xf32, #tpu.memory_space<vmem>>, vector<1x48xf32>
    %12 = vector.broadcast %11 : vector<1x48xf32> to vector<32x48xf32>
    %13 = arith.addf %10, %12 : vector<32x48xf32>
    %cst_11 = arith.constant 0.000000e+00 : f32
    %14 = vector.broadcast %cst_11 : f32 to vector<32x48xf32>
    %15 = arith.maximumf %13, %14 : vector<32x48xf32>
    %16 = arith.truncf %15 : vector<32x48xf32> to vector<32x48xbf16>
    %c0_12 = arith.constant 0 : index
    %c0_13 = arith.constant 0 : index
    %17 = vector.load %arg6[%c0_12, %c0_13] : memref<32x48xbf16, #tpu.memory_space<vmem>>, vector<32x48xbf16>
    tpu.vector_store %arg6[%c0_12, %c0_13], %16 {strides = array<i32>} : memref<32x48xbf16, #tpu.memory_space<vmem>>, vector<32x48xbf16>,
    return
  }
  func.func @transform_0(%arg0: i32) -> (i32, i32) {
    %c0_i32 = arith.constant 0 : i32
    %c0_i32_0 = arith.constant 0 : i32
    return %arg0, %c0_i32 : i32, i32
  }
  func.func @transform_1(%arg0: i32) -> (i32, i32) {
    %c0_i32 = arith.constant 0 : i32
    %c0_i32_0 = arith.constant 0 : i32
    %c0_i32_1 = arith.constant 0 : i32
    return %c0_i32, %c0_i32_0 : i32, i32
  }
  func.func @transform_2(%arg0: i32) -> (i32, i32) {
    %c0_i32 = arith.constant 0 : i32
    %c0_i32_0 = arith.constant 0 : i32
    %c0_i32_1 = arith.constant 0 : i32
    return %c0_i32, %c0_i32_0 : i32, i32
  }
  func.func @transform_3(%arg0: i32) -> (i32, i32) {
    %c0_i32 = arith.constant 0 : i32
    %c0_i32_0 = arith.constant 0 : i32
    %c0_i32_1 = arith.constant 0 : i32
    return %c0_i32, %c0_i32_0 : i32, i32
  }
  func.func @transform_4(%arg0: i32) -> (i32, i32) {
    %c0_i32 = arith.constant 0 : i32
    %c0_i32_0 = arith.constant 0 : i32
    %c0_i32_1 = arith.constant 0 : i32
    return %c0_i32, %c0_i32_0 : i32, i32
  }
  func.func @transform_5(%arg0: i32) -> (i32, i32) {
    %c0_i32 = arith.constant 0 : i32
    %c0_i32_0 = arith.constant 0 : i32
    return %arg0, %c0_i32 : i32, i32
  }
}

module attributes {stable_mosaic.version = 11 : i64} {
  func.func @_fused_head_kernel(%arg0: i32, %arg1: memref<128x24xbf16, #tpu.memory_space<vmem>>, %arg2: memref<128x48xbf16, #tpu.memory_space<vmem>>, %arg3: memref<128x256xbf16, #tpu.memory_space<vmem>>, %arg4: memref<128x256xbf16, #tpu.memory_space<vmem>>, %arg5: memref<24x48xbf16, #tpu.memory_space<vmem>>, %arg6: memref<1x48xf32, #tpu.memory_space<vmem>>, %arg7: memref<48x128xbf16, #tpu.memory_space<vmem>>, %arg8: memref<256x128xbf16, #tpu.memory_space<vmem>>, %arg9: memref<1x128xf32, #tpu.memory_space<vmem>>, %arg10: memref<128x128xbf16, #tpu.memory_space<vmem>>) attributes {dimension_semantics = [#tpu.dimension_semantics<parallel>], iteration_bounds = array<i64: 1>, scalar_prefetch = 0 : i64, scratch_operands = 0 : i64, tpu.core_type = #tpu.core_type<tc>, window_params = [{transform_indices = @transform_0, window_bounds = array<i64: 128, 24>}, {transform_indices = @transform_1, window_bounds = array<i64: 128, 48>}, {transform_indices = @transform_2, window_bounds = array<i64: 128, 256>}, {transform_indices = @transform_3, window_bounds = array<i64: 128, 256>}, {pipeline_mode = #tpu.pipeline_mode<synchronous>, transform_indices = @transform_4, window_bounds = array<i64: 24, 48>}, {pipeline_mode = #tpu.pipeline_mode<synchronous>, transform_indices = @transform_5, window_bounds = array<i64: 1, 48>}, {pipeline_mode = #tpu.pipeline_mode<synchronous>, transform_indices = @transform_6, window_bounds = array<i64: 48, 128>}, {pipeline_mode = #tpu.pipeline_mode<synchronous>, transform_indices = @transform_7, window_bounds = array<i64: 256, 128>}, {pipeline_mode = #tpu.pipeline_mode<synchronous>, transform_indices = @transform_8, window_bounds = array<i64: 1, 128>}, {transform_indices = @transform_9, window_bounds = array<i64: 128, 128>}]} {
    %c0 = arith.constant 0 : index
    %c0_0 = arith.constant 0 : index
    %0 = vector.load %arg1[%c0, %c0_0] : memref<128x24xbf16, #tpu.memory_space<vmem>>, vector<128x24xbf16>
    %c0_1 = arith.constant 0 : index
    %c0_2 = arith.constant 0 : index
    %1 = vector.load %arg5[%c0_1, %c0_2] : memref<24x48xbf16, #tpu.memory_space<vmem>>, vector<24x48xbf16>
    %cst = arith.constant dense<0.000000e+00> : vector<128x48xf32>
    %2 = tpu.matmul %0, %1, %cst {dimension_numbers = #tpu.dot_dimension_numbers<[1], [0], [0], [1], [0, 0, 1, 1], [], []>} : vector<128x24xbf16>, vector<24x48xbf16>, vector<128x48xf32> -> vector<128x48xf32>
    %c0_3 = arith.constant 0 : index
    %c0_4 = arith.constant 0 : index
    %3 = vector.load %arg6[%c0_3, %c0_4] : memref<1x48xf32, #tpu.memory_space<vmem>>, vector<1x48xf32>
    %4 = vector.broadcast %3 : vector<1x48xf32> to vector<128x48xf32>
    %5 = arith.addf %2, %4 : vector<128x48xf32>
    %cst_5 = arith.constant 0.000000e+00 : f32
    %6 = vector.broadcast %cst_5 : f32 to vector<128x48xf32>
    %7 = arith.maximumf %5, %6 : vector<128x48xf32>
    %c0_6 = arith.constant 0 : index
    %c0_7 = arith.constant 0 : index
    %8 = vector.load %arg2[%c0_6, %c0_7] : memref<128x48xbf16, #tpu.memory_space<vmem>>, vector<128x48xbf16>
    %9 = arith.extf %8 : vector<128x48xbf16> to vector<128x48xf32>
    %10 = arith.addf %7, %9 : vector<128x48xf32>
    %11 = arith.truncf %10 : vector<128x48xf32> to vector<128x48xbf16>
    %c0_8 = arith.constant 0 : index
    %c0_9 = arith.constant 0 : index
    %12 = vector.load %arg3[%c0_8, %c0_9] : memref<128x256xbf16, #tpu.memory_space<vmem>>, vector<128x256xbf16>
    %13 = arith.extf %12 : vector<128x256xbf16> to vector<128x256xf32>
    %c0_10 = arith.constant 0 : index
    %c0_11 = arith.constant 0 : index
    %14 = vector.load %arg4[%c0_10, %c0_11] : memref<128x256xbf16, #tpu.memory_space<vmem>>, vector<128x256xbf16>
    %15 = arith.extf %14 : vector<128x256xbf16> to vector<128x256xf32>
    %16 = arith.addf %13, %15 : vector<128x256xf32>
    %17 = arith.truncf %16 : vector<128x256xf32> to vector<128x256xbf16>
    %c0_12 = arith.constant 0 : index
    %c0_13 = arith.constant 0 : index
    %18 = vector.load %arg7[%c0_12, %c0_13] : memref<48x128xbf16, #tpu.memory_space<vmem>>, vector<48x128xbf16>
    %cst_14 = arith.constant dense<0.000000e+00> : vector<128x128xf32>
    %19 = tpu.matmul %11, %18, %cst_14 {dimension_numbers = #tpu.dot_dimension_numbers<[1], [0], [0], [1], [0, 0, 1, 1], [], []>} : vector<128x48xbf16>, vector<48x128xbf16>, vector<128x128xf32> -> vector<128x128xf32>
    %c0_15 = arith.constant 0 : index
    %c0_16 = arith.constant 0 : index
    %20 = vector.load %arg8[%c0_15, %c0_16] : memref<256x128xbf16, #tpu.memory_space<vmem>>, vector<256x128xbf16>
    %cst_17 = arith.constant dense<0.000000e+00> : vector<128x128xf32>
    %21 = tpu.matmul %17, %20, %cst_17 {dimension_numbers = #tpu.dot_dimension_numbers<[1], [0], [0], [1], [0, 0, 1, 1], [], []>} : vector<128x256xbf16>, vector<256x128xbf16>, vector<128x128xf32> -> vector<128x128xf32>
    %22 = arith.addf %19, %21 : vector<128x128xf32>
    %c0_18 = arith.constant 0 : index
    %c0_19 = arith.constant 0 : index
    %23 = vector.load %arg9[%c0_18, %c0_19] : memref<1x128xf32, #tpu.memory_space<vmem>>, vector<1x128xf32>
    %24 = vector.broadcast %23 : vector<1x128xf32> to vector<128x128xf32>
    %25 = arith.addf %22, %24 : vector<128x128xf32>
    %26 = arith.truncf %25 : vector<128x128xf32> to vector<128x128xbf16>
    %c0_20 = arith.constant 0 : index
    %c0_21 = arith.constant 0 : index
    %27 = vector.load %arg10[%c0_20, %c0_21] : memref<128x128xbf16, #tpu.memory_space<vmem>>, vector<128x128xbf16>
    tpu.vector_store %arg10[%c0_20, %c0_21], %26 {strides = array<i32>} : memref<128x128xbf16, #tpu.memory_space<vmem>>, vector<128x128xbf16>,
    return
  }
  func.func @transform_0(%arg0: i32) -> (i32, i32) {
    %c0_i32 = arith.constant 0 : i32
    %c0_i32_0 = arith.constant 0 : i32
    return %arg0, %c0_i32 : i32, i32
  }
  func.func @transform_1(%arg0: i32) -> (i32, i32) {
    %c0_i32 = arith.constant 0 : i32
    %c0_i32_0 = arith.constant 0 : i32
    return %arg0, %c0_i32 : i32, i32
  }
  func.func @transform_2(%arg0: i32) -> (i32, i32) {
    %c0_i32 = arith.constant 0 : i32
    %c0_i32_0 = arith.constant 0 : i32
    return %arg0, %c0_i32 : i32, i32
  }
  func.func @transform_3(%arg0: i32) -> (i32, i32) {
    %c0_i32 = arith.constant 0 : i32
    %c0_i32_0 = arith.constant 0 : i32
    return %arg0, %c0_i32 : i32, i32
  }
  func.func @transform_4(%arg0: i32) -> (i32, i32) {
    %c0_i32 = arith.constant 0 : i32
    %c0_i32_0 = arith.constant 0 : i32
    %c0_i32_1 = arith.constant 0 : i32
    return %c0_i32, %c0_i32_0 : i32, i32
  }
  func.func @transform_5(%arg0: i32) -> (i32, i32) {
    %c0_i32 = arith.constant 0 : i32
    %c0_i32_0 = arith.constant 0 : i32
    %c0_i32_1 = arith.constant 0 : i32
    return %c0_i32, %c0_i32_0 : i32, i32
  }
  func.func @transform_6(%arg0: i32) -> (i32, i32) {
    %c0_i32 = arith.constant 0 : i32
    %c0_i32_0 = arith.constant 0 : i32
    %c0_i32_1 = arith.constant 0 : i32
    return %c0_i32, %c0_i32_0 : i32, i32
  }
  func.func @transform_7(%arg0: i32) -> (i32, i32) {
    %c0_i32 = arith.constant 0 : i32
    %c0_i32_0 = arith.constant 0 : i32
    %c0_i32_1 = arith.constant 0 : i32
    return %c0_i32, %c0_i32_0 : i32, i32
  }
  func.func @transform_8(%arg0: i32) -> (i32, i32) {
    %c0_i32 = arith.constant 0 : i32
    %c0_i32_0 = arith.constant 0 : i32
    %c0_i32_1 = arith.constant 0 : i32
    return %c0_i32, %c0_i32_0 : i32, i32
  }
  func.func @transform_9(%arg0: i32) -> (i32, i32) {
    %c0_i32 = arith.constant 0 : i32
    %c0_i32_0 = arith.constant 0 : i32
    return %arg0, %c0_i32 : i32, i32
  }
}

</mosaic_0001>

<llo_original>
// kernel: rain_forward.2
$region0: #{rain_forward.2}
  #allocation0 [shape = 'u32[]', space=smem, size = 0x4, offset = 0x4, fixed_abs, tag = 'smem constant byte address 0x4 - core index']
  #allocation1 [shape = 'u32[144,128]{1,0:T(1,128)}', space=vmem, size = 0x12000, scoped, tag = 'internal scratch']
  %s0 = inlined_call_operand.vmem [shape: bf16[32,40], index: 0, kind: input, shape index: {}]
  %s1 = inlined_call_operand.vmem [shape: bf16[40,80], index: 1, kind: input, shape index: {}]
  %s2 = inlined_call_operand.vmem [shape: f32[1,80], index: 2, kind: input, shape index: {}]
  %s3 = inlined_call_operand.vmem [shape: bf16[80,48], index: 3, kind: input, shape index: {}]
  %s4 = inlined_call_operand.vmem [shape: f32[1,48], index: 4, kind: input, shape index: {}]
  %s5 = inlined_call_operand.vmem [shape: bf16[32,48], index: 5, kind: output, shape index: {}]
  %s6 = sld [smem:[#allocation0]]
  $region30: #{rain_forward.2} parent=0
    _
  %s8 = ssub.s32 1, %s6
  %s9 = scalar_select 0, %s8, %s6
  // Predicated region
  $region2: #{rain_forward.2} parent=0 // pred_check
    _
  $region3: #{rain_forward.2} parent=0 // pred_check_branch
    %11 = sbr.rel (0) target = $region5
  $region4: #{rain_forward.2} parent=0 // pred_region
    _
  $region5: #{rain_forward.2} parent=0 // pred_fallthru
    _
  // Predicated region
  $region6: #{rain_forward.2} parent=0 // pred_check
    _
  $region7: #{rain_forward.2} parent=0 // pred_check_branch
    %13 = sbr.rel (0) target = $region9
  $region8: #{rain_forward.2} parent=0 // pred_region
    _
  $region9: #{rain_forward.2} parent=0 // pred_fallthru
    _
  // Predicated region
  $region10: #{rain_forward.2} parent=0 // pred_check
    _
  $region11: #{rain_forward.2} parent=0 // pred_check_branch
    %15 = sbr.rel (0) target = $region13
  $region12: #{rain_forward.2} parent=0 // pred_region
    _
  $region13: #{rain_forward.2} parent=0 // pred_fallthru
    _
  // Predicated region
  $region14: #{rain_forward.2} parent=0 // pred_check
    _
  $region15: #{rain_forward.2} parent=0 // pred_check_branch
    %17 = sbr.rel (0) target = $region17
  $region16: #{rain_forward.2} parent=0 // pred_region
    _
  $region17: #{rain_forward.2} parent=0 // pred_fallthru
    _
  // Predicated region
  $region18: #{rain_forward.2} parent=0 // pred_check
    _
  $region19: #{rain_forward.2} parent=0 // pred_check_branch
    %19 = sbr.rel (0) target = $region21
  $region20: #{rain_forward.2} parent=0 // pred_region
    _
  $region21: #{rain_forward.2} parent=0 // pred_fallthru
    _
  %v21 = vld [vmem:[%s0] sm:$0xf]
  %v22 = vld [vmem:[%s0 + $0x4] sm:$0xf]
  %v23 = vld [vmem:[%s0 + $0x8] sm:$0xf]
  %v24 = vld [vmem:[%s0 + $0xc] sm:$0xf]
  %v25 = vld [vmem:[%s1] sm:$0xf]
  %v26 = vld [vmem:[%s1 + $0x4] sm:$0xf]
  %v27 = vld [vmem:[%s1 + $0x8] sm:$0xf]
  %v28 = vld [vmem:[%s1 + $0xc] sm:$0xf]
  %v29 = vld [vmem:[%s1 + $0x10] sm:$0xf]
  %v30 = vld [vmem:[%s2] sm:$0x1]
  %v32 = vlaneseq
  %v33 = vshrl.u32 %v32, 7
  %v34 = vsub.s32 0, %v33
  %v35 = vrot.slane %v30, %v34
  %v41 = vunpack.c.l.b16 %v21
  %v42 = vunpack.c.l.b16 %v22
  %v43 = vunpack.c.l.b16 %v23
  %v44 = vunpack.c.l.b16 %v24
  %v45 = vpack.c.b16 %v42, %v41
  %v46 = vpack.c.b16 %v44, %v43
  %v52 = vunpack.c.l.b16 %v25
  %v53 = vunpack.c.l.b16 %v26
  %v54 = vunpack.c.l.b16 %v27
  %v55 = vunpack.c.l.b16 %v28
  %v56 = vunpack.c.l.b16 %v29
  %v57 = vpack.c.b16 %v53, %v52
  %v58 = vpack.c.b16 %v55, %v54
  %v59 = vpack.c.b16 %v56, %v56
  %vm62 = vcmask 326656
  %v64 = vsel %vm62, %v45, 0
  %v67 = vsel %vm62, %v46, 0
  %vm69 = vcmask 1043456
  %v71 = vsel %vm69, %v59, 0
  %73 = vmatprep.subr.bf16.mxu0 0
  %74 = vmatpush1.bf16.msra.mxu0 0
  %75 = vmatprep.subr.bf16.mxu0 0
  %76 = vmatpush1.bf16.msra.mxu0 0
  %77 = vmatprep.subr.bf16.mxu0 0
  %78 = vmatpush1.bf16.msra.mxu0 0
  %79 = vmatprep.subr.bf16.mxu0 0
  %80 = vmatpush1.bf16.msra.mxu0 0
  %81 = vmatprep.subr.bf16.mxu0 0
  %82 = vmatpush1.bf16.msra.mxu0 0
  %83 = vmatprep.subr.bf16.mxu0 0
  %84 = vmatpush1.bf16.msra.mxu0 %v71
  %85 = vmatprep.subr.bf16.mxu0 0
  %86 = vmatpush1.bf16.msra.mxu0 %v58
  %87 = vmatprep.subr.bf16.mxu0 0
  %88 = vmatpush1.bf16.msra.mxu0 %v57
  %89 = vmatprep.subr.bf16.mxu0 0
  %90 = vmatpush2.bf16.msra.mxu0 0
  %91 = vmatprep.subr.bf16.mxu0 0
  %92 = vmatpush2.bf16.msra.mxu0 0
  %93 = vmatprep.subr.bf16.mxu0 0
  %94 = vmatpush2.bf16.msra.mxu0 0
  %95 = vmatprep.subr.bf16.mxu0 0
  %96 = vmatpush2.bf16.msra.mxu0 0
  %97 = vmatprep.subr.bf16.mxu0 0
  %98 = vmatpush2.bf16.msra.mxu0 0
  %99 = vmatprep.subr.bf16.mxu0 0
  %100 = vmatpush2.bf16.msra.mxu0 0
  %101 = vmatprep.subr.bf16.mxu0 0
  %102 = vmatpush2.bf16.msra.mxu0 0
  %103 = vmatprep.subr.bf16.mxu0 0
  %104 = vmatpush2.bf16.msra.mxu0 0
  %105 = vmatprep.mubr.bf16.mxu0 0
  %106 = vmatmul.mubr.bf16.gmra.mxu0 %v64
  %v107 = vpop.f32.mrf.mxu0
  %v108 = vadd.f32 %v35, %v107
  %v109 = vpop.f32.mrf.mxu0
  %v110 = vpop.f32.mrf.mxu0
  %v111 = vadd.f32 %v35, %v110
  %v112 = vpop.f32.mrf.mxu0
  %113 = vmatprep.mubr.bf16.mxu0 0
  %114 = vmatmul.mubr.bf16.gmra.mxu0 %v67
  %v115 = vpop.f32.mrf.mxu0
  %v116 = vadd.f32 %v35, %v115
  %v117 = vpop.f32.mrf.mxu0
  %v118 = vpop.f32.mrf.mxu0
  %v119 = vadd.f32 %v35, %v118
  %v120 = vpop.f32.mrf.mxu0
  %121 = vdwg.mxu0
  %v122 = vmax.f32 %v108, 0.0
  %v123 = vmax.f32 %v111, 0.0
  %v124 = vmax.f32 %v116, 0.0
  %v125 = vmax.f32 %v119, 0.0
  %v126 = vpack.c.bf16 %v123, %v122
  %v127 = vpack.c.bf16 %v125, %v124
  %v128 = vld [vmem:[%s3] sm:$0xf]
  %v129 = vld [vmem:[%s3 + $0x4] sm:$0xf]
  %v130 = vld [vmem:[%s3 + $0x8] sm:$0xf]
  %v131 = vld [vmem:[%s3 + $0xc] sm:$0xf]
  %v132 = vld [vmem:[%s3 + $0x10] sm:$0xf]
  %v133 = vld [vmem:[%s3 + $0x14] sm:$0xf]
  %v134 = vld [vmem:[%s3 + $0x18] sm:$0xf]
  %v135 = vld [vmem:[%s3 + $0x1c] sm:$0xf]
  %v136 = vld [vmem:[%s3 + $0x20] sm:$0xf]
  %v137 = vld [vmem:[%s3 + $0x24] sm:$0xf]
  %v138 = vld [vmem:[%s4] sm:$0x1]
  %v140 = vlaneseq
  %v141 = vshrl.u32 %v140, 7
  %v142 = vsub.s32 0, %v141
  %v143 = vrot.slane %v138, %v142
  %v155 = vunpack.c.l.b16 %v128
  %v156 = vunpack.c.l.b16 %v129
  %v157 = vunpack.c.l.b16 %v130
  %v158 = vunpack.c.l.b16 %v131
  %v159 = vunpack.c.l.b16 %v132
  %v160 = vunpack.c.l.b16 %v133
  %v161 = vunpack.c.l.b16 %v134
  %v162 = vunpack.c.l.b16 %v135
  %v163 = vunpack.c.l.b16 %v136
  %v164 = vunpack.c.l.b16 %v137
  %v165 = vpack.c.b16 %v156, %v155
  %v166 = vpack.c.b16 %v158, %v157
  %v167 = vpack.c.b16 %v160, %v159
  %v168 = vpack.c.b16 %v162, %v161
  %v169 = vpack.c.b16 %v164, %v163
  %vm175 = vcmask 654336
  %v177 = vsel %vm175, %v126, 0
  %v180 = vsel %vm175, %v127, 0
  %182 = vmatprep.subr.bf16.mxu0 0
  %183 = vmatpush1.bf16.msra.mxu0 0
  %184 = vmatprep.subr.bf16.mxu0 0
  %185 = vmatpush1.bf16.msra.mxu0 0
  %186 = vmatprep.subr.bf16.mxu0 0
  %187 = vmatpush1.bf16.msra.mxu0 0
  %188 = vmatprep.subr.bf16.mxu0 0
  %189 = vmatpush1.bf16.msra.mxu0 %v169
  %190 = vmatprep.subr.bf16.mxu0 0
  %191 = vmatpush1.bf16.msra.mxu0 %v168
  %192 = vmatprep.subr.bf16.mxu0 0
  %193 = vmatpush1.bf16.msra.mxu0 %v167
  %194 = vmatprep.subr.bf16.mxu0 0
  %195 = vmatpush1.bf16.msra.mxu0 %v166
  %196 = vmatprep.subr.bf16.mxu0 0
  %197 = vmatpush1.bf16.msra.mxu0 %v165
  %198 = vmatprep.subr.bf16.mxu0 0
  %199 = vmatpush2.bf16.msra.mxu0 0
  %200 = vmatprep.subr.bf16.mxu0 0
  %201 = vmatpush2.bf16.msra.mxu0 0
  %202 = vmatprep.subr.bf16.mxu0 0
  %203 = vmatpush2.bf16.msra.mxu0 0
  %204 = vmatprep.subr.bf16.mxu0 0
  %205 = vmatpush2.bf16.msra.mxu0 0
  %206 = vmatprep.subr.bf16.mxu0 0
  %207 = vmatpush2.bf16.msra.mxu0 0
  %208 = vmatprep.subr.bf16.mxu0 0
  %209 = vmatpush2.bf16.msra.mxu0 0
  %210 = vmatprep.subr.bf16.mxu0 0
  %211 = vmatpush2.bf16.msra.mxu0 0
  %212 = vmatprep.subr.bf16.mxu0 0
  %213 = vmatpush2.bf16.msra.mxu0 0
  %214 = vmatprep.mubr.bf16.mxu0 0
  %215 = vmatmul.mubr.bf16.gmra.mxu0 %v177
  %v216 = vpop.f32.mrf.mxu0
  %v217 = vadd.f32 %v143, %v216
  %v218 = vpop.f32.mrf.mxu0
  %v219 = vpop.f32.mrf.mxu0
  %v220 = vadd.f32 %v143, %v219
  %v221 = vpop.f32.mrf.mxu0
  %222 = vmatprep.mubr.bf16.mxu0 0
  %223 = vmatmul.mubr.bf16.gmra.mxu0 %v180
  %v224 = vpop.f32.mrf.mxu0
  %v225 = vadd.f32 %v143, %v224
  %v226 = vpop.f32.mrf.mxu0
  %v227 = vpop.f32.mrf.mxu0
  %v228 = vadd.f32 %v143, %v227
  %v229 = vpop.f32.mrf.mxu0
  %230 = vdwg.mxu0
  %v231 = vmax.f32 %v217, 0.0
  %v232 = vmax.f32 %v220, 0.0
  %v233 = vmax.f32 %v225, 0.0
  %v234 = vmax.f32 %v228, 0.0
  %v235 = vpack.c.bf16 %v232, %v231
  %v236 = vpack.c.bf16 %v234, %v233
  %v239 = vunpack.c.l.b16 %v235
  %v240 = vunpack.c.h.b16 %v235
  %v241 = vunpack.c.l.b16 %v236
  %v242 = vunpack.c.h.b16 %v236
  %v243 = vpack.c.b16 %v239, %v239
  %v244 = vpack.c.b16 %v240, %v240
  %v245 = vpack.c.b16 %v241, %v241
  %v246 = vpack.c.b16 %v242, %v242
  %vm251 = vcmask 388096
  %252 = vst.msk [vmem:[%s5] sm:$0xf] %vm251, %v243
  %253 = vst.msk [vmem:[%s5 + $0x4] sm:$0xf] %vm251, %v244
  %254 = vst.msk [vmem:[%s5 + $0x8] sm:$0xf] %vm251, %v245
  %255 = vst.msk [vmem:[%s5 + $0xc] sm:$0xf] %vm251, %v246
  // Predicated region
  $region22: #{rain_forward.2} parent=0 // pred_check
    _
  $region23: #{rain_forward.2} parent=0 // pred_check_branch
    %257 = sbr.rel (0) target = $region25
  $region24: #{rain_forward.2} parent=0 // pred_region
    _
  $region25: #{rain_forward.2} parent=0 // pred_fallthru
    _
  // Predicated region
  $region26: #{rain_forward.2} parent=0 // pred_check
    _
  $region27: #{rain_forward.2} parent=0 // pred_check_branch
    %259 = sbr.rel (0) target = $region29
  $region28: #{rain_forward.2} parent=0 // pred_region
    _
  $region29: #{rain_forward.2} parent=0 // pred_fallthru
    _

// kernel: rain_forward.3
$region0: #{rain_forward.3}
  #allocation0 [shape = 'u32[]', space=smem, size = 0x4, offset = 0x4, fixed_abs, tag = 'smem constant byte address 0x4 - core index']
  #allocation1 [shape = 'u32[144,128]{1,0:T(1,128)}', space=vmem, size = 0x12000, scoped, tag = 'internal scratch']
  %s0 = inlined_call_operand.vmem [shape: bf16[128,24], index: 0, kind: input, shape index: {}]
  %s1 = inlined_call_operand.vmem [shape: bf16[128,48], index: 1, kind: input, shape index: {}]
  %s2 = inlined_call_operand.vmem [shape: bf16[128,256], index: 2, kind: input, shape index: {}]
  %s3 = inlined_call_operand.vmem [shape: bf16[128,256], index: 3, kind: input, shape index: {}]
  %s4 = inlined_call_operand.vmem [shape: bf16[24,48], index: 4, kind: input, shape index: {}]
  %s5 = inlined_call_operand.vmem [shape: f32[1,48], index: 5, kind: input, shape index: {}]
  %s6 = inlined_call_operand.vmem [shape: bf16[48,128], index: 6, kind: input, shape index: {}]
  %s7 = inlined_call_operand.vmem [shape: bf16[256,128], index: 7, kind: input, shape index: {}]
  %s8 = inlined_call_operand.vmem [shape: f32[1,128], index: 8, kind: input, shape index: {}]
  %s9 = inlined_call_operand.vmem [shape: bf16[128,128], index: 9, kind: output, shape index: {}]
  %s10 = sld [smem:[#allocation0]]
  $region46: #{rain_forward.3} parent=0
    _
  %s12 = ssub.s32 1, %s10
  %s13 = scalar_select 0, %s12, %s10
  // Predicated region
  $region2: #{rain_forward.3} parent=0 // pred_check
    _
  $region3: #{rain_forward.3} parent=0 // pred_check_branch
    %15 = sbr.rel (0) target = $region5
  $region4: #{rain_forward.3} parent=0 // pred_region
    _
  $region5: #{rain_forward.3} parent=0 // pred_fallthru
    _
  // Predicated region
  $region6: #{rain_forward.3} parent=0 // pred_check
    _
  $region7: #{rain_forward.3} parent=0 // pred_check_branch
    %17 = sbr.rel (0) target = $region9
  $region8: #{rain_forward.3} parent=0 // pred_region
    _
  $region9: #{rain_forward.3} parent=0 // pred_fallthru
    _
  // Predicated region
  $region10: #{rain_forward.3} parent=0 // pred_check
    _
  $region11: #{rain_forward.3} parent=0 // pred_check_branch
    %19 = sbr.rel (0) target = $region13
  $region12: #{rain_forward.3} parent=0 // pred_region
    _
  $region13: #{rain_forward.3} parent=0 // pred_fallthru
    _
  // Predicated region
  $region14: #{rain_forward.3} parent=0 // pred_check
    _
  $region15: #{rain_forward.3} parent=0 // pred_check_branch
    %21 = sbr.rel (0) target = $region17
  $region16: #{rain_forward.3} parent=0 // pred_region
    _
  $region17: #{rain_forward.3} parent=0 // pred_fallthru
    _
  // Predicated region
  $region18: #{rain_forward.3} parent=0 // pred_check
    _
  $region19: #{rain_forward.3} parent=0 // pred_check_branch
    %23 = sbr.rel (0) target = $region21
  $region20: #{rain_forward.3} parent=0 // pred_region
    _
  $region21: #{rain_forward.3} parent=0 // pred_fallthru
    _
  // Predicated region
  $region22: #{rain_forward.3} parent=0 // pred_check
    _
  $region23: #{rain_forward.3} parent=0 // pred_check_branch
    %25 = sbr.rel (0) target = $region25
  $region24: #{rain_forward.3} parent=0 // pred_region
    _
  $region25: #{rain_forward.3} parent=0 // pred_fallthru
    _
  // Predicated region
  $region26: #{rain_forward.3} parent=0 // pred_check
    _
  $region27: #{rain_forward.3} parent=0 // pred_check_branch
    %27 = sbr.rel (0) target = $region29
  $region28: #{rain_forward.3} parent=0 // pred_region
    _
  $region29: #{rain_forward.3} parent=0 // pred_fallthru
    _
  // Predicated region
  $region30: #{rain_forward.3} parent=0 // pred_check
    _
  $region31: #{rain_forward.3} parent=0 // pred_check_branch
    %29 = sbr.rel (0) target = $region33
  $region32: #{rain_forward.3} parent=0 // pred_region
    _
  $region33: #{rain_forward.3} parent=0 // pred_fallthru
    _
  // Predicated region
  $region34: #{rain_forward.3} parent=0 // pred_check
    _
  $region35: #{rain_forward.3} parent=0 // pred_check_branch
    %31 = sbr.rel (0) target = $region37
  $region36: #{rain_forward.3} parent=0 // pred_region
    _
  $region37: #{rain_forward.3} parent=0 // pred_fallthru
    _
  %v33 = vld [vmem:[%s0] sm:$0xf]
  %v34 = vld [vmem:[%s0 + $0x4] sm:$0xf]
  %v35 = vld [vmem:[%s0 + $0x8] sm:$0xf]
  %v36 = vld [vmem:[%s0 + $0xc] sm:$0xf]
  %v37 = vld [vmem:[%s0 + $0x10] sm:$0xf]
  %v38 = vld [vmem:[%s0 + $0x14] sm:$0xf]
  %v39 = vld [vmem:[%s0 + $0x18] sm:$0xf]
  %v40 = vld [vmem:[%s0 + $0x1c] sm:$0xf]
  %v41 = vld [vmem:[%s0 + $0x20] sm:$0xf]
  %v42 = vld [vmem:[%s0 + $0x24] sm:$0xf]
  %v43 = vld [vmem:[%s0 + $0x28] sm:$0xf]
  %v44 = vld [vmem:[%s0 + $0x2c] sm:$0xf]
  %v45 = vld [vmem:[%s0 + $0x30] sm:$0xf]
  %v46 = vld [vmem:[%s0 + $0x34] sm:$0xf]
  %v47 = vld [vmem:[%s0 + $0x38] sm:$0xf]
  %v48 = vld [vmem:[%s0 + $0x3c] sm:$0xf]
  %v49 = vld [vmem:[%s4] sm:$0xf]
  %v50 = vld [vmem:[%s4 + $0x4] sm:$0xf]
  %v51 = vld [vmem:[%s4 + $0x8] sm:$0xf]
  %v52 = vld [vmem:[%s5] sm:$0x1]
  %v54 = vlaneseq
  %v55 = vshrl.u32 %v54, 7
  %v56 = vsub.s32 0, %v55
  %v57 = vrot.slane %v52, %v56
  %v75 = vunpack.c.l.b16 %v33
  %v76 = vunpack.c.l.b16 %v34
  %v77 = vunpack.c.l.b16 %v35
  %v78 = vunpack.c.l.b16 %v36
  %v79 = vunpack.c.l.b16 %v37
  %v80 = vunpack.c.l.b16 %v38
  %v81 = vunpack.c.l.b16 %v39
  %v82 = vunpack.c.l.b16 %v40
  %v83 = vunpack.c.l.b16 %v41
  %v84 = vunpack.c.l.b16 %v42
  %v85 = vunpack.c.l.b16 %v43
  %v86 = vunpack.c.l.b16 %v44
  %v87 = vunpack.c.l.b16 %v45
  %v88 = vunpack.c.l.b16 %v46
  %v89 = vunpack.c.l.b16 %v47
  %v90 = vunpack.c.l.b16 %v48
  %v91 = vpack.c.b16 %v76, %v75
  %v92 = vpack.c.b16 %v78, %v77
  %v93 = vpack.c.b16 %v80, %v79
  %v94 = vpack.c.b16 %v82, %v81
  %v95 = vpack.c.b16 %v84, %v83
  %v96 = vpack.c.b16 %v86, %v85
  %v97 = vpack.c.b16 %v88, %v87
  %v98 = vpack.c.b16 %v90, %v89
  %v102 = vunpack.c.l.b16 %v49
  %v103 = vunpack.c.l.b16 %v50
  %v104 = vunpack.c.l.b16 %v51
  %v105 = vpack.c.b16 %v103, %v102
  %v106 = vpack.c.b16 %v104, %v104
  %vm108 = vcmask 195584
  %v110 = vsel %vm108, %v91, 0
  %v113 = vsel %vm108, %v92, 0
  %v116 = vsel %vm108, %v93, 0
  %v119 = vsel %vm108, %v94, 0
  %v122 = vsel %vm108, %v95, 0
  %v125 = vsel %vm108, %v96, 0
  %v128 = vsel %vm108, %v97, 0
  %v131 = vsel %vm108, %v98, 0
  %vm133 = vcmask 1043456
  %v135 = vsel %vm133, %v106, 0
  %137 = vmatprep.subr.bf16.mxu0 0
  %138 = vmatpush1.bf16.msra.mxu0 0
  %139 = vmatprep.subr.bf16.mxu0 0
  %140 = vmatpush1.bf16.msra.mxu0 0
  %141 = vmatprep.subr.bf16.mxu0 0
  %142 = vmatpush1.bf16.msra.mxu0 0
  %143 = vmatprep.subr.bf16.mxu0 0
  %144 = vmatpush1.bf16.msra.mxu0 0
  %145 = vmatprep.subr.bf16.mxu0 0
  %146 = vmatpush1.bf16.msra.mxu0 0
  %147 = vmatprep.subr.bf16.mxu0 0
  %148 = vmatpush1.bf16.msra.mxu0 0
  %149 = vmatprep.subr.bf16.mxu0 0
  %150 = vmatpush1.bf16.msra.mxu0 %v135
  %151 = vmatprep.subr.bf16.mxu0 0
  %152 = vmatpush1.bf16.msra.mxu0 %v105
  %153 = vmatprep.subr.bf16.mxu0 0
  %154 = vmatpush2.bf16.msra.mxu0 0
  %155 = vmatprep.subr.bf16.mxu0 0
  %156 = vmatpush2.bf16.msra.mxu0 0
  %157 = vmatprep.subr.bf16.mxu0 0
  %158 = vmatpush2.bf16.msra.mxu0 0
  %159 = vmatprep.subr.bf16.mxu0 0
  %160 = vmatpush2.bf16.msra.mxu0 0
  %161 = vmatprep.subr.bf16.mxu0 0
  %162 = vmatpush2.bf16.msra.mxu0 0
  %163 = vmatprep.subr.bf16.mxu0 0
  %164 = vmatpush2.bf16.msra.mxu0 0
  %165 = vmatprep.subr.bf16.mxu0 0
  %166 = vmatpush2.bf16.msra.mxu0 0
  %167 = vmatprep.subr.bf16.mxu0 0
  %168 = vmatpush2.bf16.msra.mxu0 0
  %169 = vmatprep.mubr.bf16.mxu0 0
  %170 = vmatmul.mubr.bf16.gmra.mxu0 %v110
  %v171 = vpop.f32.mrf.mxu0
  %v172 = vadd.f32 %v57, %v171
  %v173 = vpop.f32.mrf.mxu0
  %v174 = vpop.f32.mrf.mxu0
  %v175 = vadd.f32 %v57, %v174
  %v176 = vpop.f32.mrf.mxu0
  %177 = vmatprep.mubr.bf16.mxu0 0
  %178 = vmatmul.mubr.bf16.gmra.mxu0 %v113
  %v179 = vpop.f32.mrf.mxu0
  %v180 = vadd.f32 %v57, %v179
  %v181 = vpop.f32.mrf.mxu0
  %v182 = vpop.f32.mrf.mxu0
  %v183 = vadd.f32 %v57, %v182
  %v184 = vpop.f32.mrf.mxu0
  %185 = vmatprep.mubr.bf16.mxu0 0
  %186 = vmatmul.mubr.bf16.gmra.mxu0 %v116
  %v187 = vpop.f32.mrf.mxu0
  %v188 = vadd.f32 %v57, %v187
  %v189 = vpop.f32.mrf.mxu0
  %v190 = vpop.f32.mrf.mxu0
  %v191 = vadd.f32 %v57, %v190
  %v192 = vpop.f32.mrf.mxu0
  %193 = vmatprep.mubr.bf16.mxu0 0
  %194 = vmatmul.mubr.bf16.gmra.mxu0 %v119
  %v195 = vpop.f32.mrf.mxu0
  %v196 = vadd.f32 %v57, %v195
  %v197 = vpop.f32.mrf.mxu0
  %v198 = vpop.f32.mrf.mxu0
  %v199 = vadd.f32 %v57, %v198
  %v200 = vpop.f32.mrf.mxu0
  %201 = vmatprep.mubr.bf16.mxu0 0
  %202 = vmatmul.mubr.bf16.gmra.mxu0 %v122
  %v203 = vpop.f32.mrf.mxu0
  %v204 = vadd.f32 %v57, %v203
  %v205 = vpop.f32.mrf.mxu0
  %v206 = vpop.f32.mrf.mxu0
  %v207 = vadd.f32 %v57, %v206
  %v208 = vpop.f32.mrf.mxu0
  %209 = vmatprep.mubr.bf16.mxu0 0
  %210 = vmatmul.mubr.bf16.gmra.mxu0 %v125
  %v211 = vpop.f32.mrf.mxu0
  %v212 = vadd.f32 %v57, %v211
  %v213 = vpop.f32.mrf.mxu0
  %v214 = vpop.f32.mrf.mxu0
  %v215 = vadd.f32 %v57, %v214
  %v216 = vpop.f32.mrf.mxu0
  %217 = vmatprep.mubr.bf16.mxu0 0
  %218 = vmatmul.mubr.bf16.gmra.mxu0 %v128
  %v219 = vpop.f32.mrf.mxu0
  %v220 = vadd.f32 %v57, %v219
  %v221 = vpop.f32.mrf.mxu0
  %v222 = vpop.f32.mrf.mxu0
  %v223 = vadd.f32 %v57, %v222
  %v224 = vpop.f32.mrf.mxu0
  %225 = vmatprep.mubr.bf16.mxu0 0
  %226 = vmatmul.mubr.bf16.gmra.mxu0 %v131
  %v227 = vpop.f32.mrf.mxu0
  %v228 = vadd.f32 %v57, %v227
  %v229 = vpop.f32.mrf.mxu0
  %v230 = vpop.f32.mrf.mxu0
  %v231 = vadd.f32 %v57, %v230
  %v232 = vpop.f32.mrf.mxu0
  %233 = vdwg.mxu0
  %v234 = vmax.f32 %v172, 0.0
  %v235 = vmax.f32 %v175, 0.0
  %v236 = vmax.f32 %v180, 0.0
  %v237 = vmax.f32 %v183, 0.0
  %v238 = vmax.f32 %v188, 0.0
  %v239 = vmax.f32 %v191, 0.0
  %v240 = vmax.f32 %v196, 0.0
  %v241 = vmax.f32 %v199, 0.0
  %v242 = vmax.f32 %v204, 0.0
  %v243 = vmax.f32 %v207, 0.0
  %v244 = vmax.f32 %v212, 0.0
  %v245 = vmax.f32 %v215, 0.0
  %v246 = vmax.f32 %v220, 0.0
  %v247 = vmax.f32 %v223, 0.0
  %v248 = vmax.f32 %v228, 0.0
  %v249 = vmax.f32 %v231, 0.0
  %v250 = vld [vmem:[%s1] sm:$0xf]
  %v251 = vld [vmem:[%s1 + $0x4] sm:$0xf]
  %v252 = vld [vmem:[%s1 + $0x8] sm:$0xf]
  %v253 = vld [vmem:[%s1 + $0xc] sm:$0xf]
  %v254 = vld [vmem:[%s1 + $0x10] sm:$0xf]
  %v255 = vld [vmem:[%s1 + $0x14] sm:$0xf]
  %v256 = vld [vmem:[%s1 + $0x18] sm:$0xf]
  %v257 = vld [vmem:[%s1 + $0x1c] sm:$0xf]
  %v258 = vld [vmem:[%s1 + $0x20] sm:$0xf]
  %v259 = vld [vmem:[%s1 + $0x24] sm:$0xf]
  %v260 = vld [vmem:[%s1 + $0x28] sm:$0xf]
  %v261 = vld [vmem:[%s1 + $0x2c] sm:$0xf]
  %v262 = vld [vmem:[%s1 + $0x30] sm:$0xf]
  %v263 = vld [vmem:[%s1 + $0x34] sm:$0xf]
  %v264 = vld [vmem:[%s1 + $0x38] sm:$0xf]
  %v265 = vld [vmem:[%s1 + $0x3c] sm:$0xf]
  %v266 = vunpack.c.l.bf16 %v250
  %v267 = vunpack.c.l.bf16 %v251
  %v268 = vunpack.c.l.bf16 %v252
  %v269 = vunpack.c.l.bf16 %v253
  %v270 = vunpack.c.l.bf16 %v254
  %v271 = vunpack.c.l.bf16 %v255
  %v272 = vunpack.c.l.bf16 %v256
  %v273 = vunpack.c.l.bf16 %v257
  %v274 = vunpack.c.l.bf16 %v258
  %v275 = vunpack.c.l.bf16 %v259
  %v276 = vunpack.c.l.bf16 %v260
  %v277 = vunpack.c.l.bf16 %v261
  %v278 = vunpack.c.l.bf16 %v262
  %v279 = vunpack.c.l.bf16 %v263
  %v280 = vunpack.c.l.bf16 %v264
  %v281 = vunpack.c.l.bf16 %v265
  %v282 = vadd.f32 %v234, %v266
  %v283 = vadd.f32 %v235, %v267
  %v284 = vadd.f32 %v236, %v268
  %v285 = vadd.f32 %v237, %v269
  %v286 = vadd.f32 %v238, %v270
  %v287 = vadd.f32 %v239, %v271
  %v288 = vadd.f32 %v240, %v272
  %v289 = vadd.f32 %v241, %v273
  %v290 = vadd.f32 %v242, %v274
  %v291 = vadd.f32 %v243, %v275
  %v292 = vadd.f32 %v244, %v276
  %v293 = vadd.f32 %v245, %v277
  %v294 = vadd.f32 %v246, %v278
  %v295 = vadd.f32 %v247, %v279
  %v296 = vadd.f32 %v248, %v280
  %v297 = vadd.f32 %v249, %v281
  %v298 = vpack.c.bf16 %v283, %v282
  %v299 = vpack.c.bf16 %v285, %v284
  %v300 = vpack.c.bf16 %v287, %v286
  %v301 = vpack.c.bf16 %v289, %v288
  %v302 = vpack.c.bf16 %v291, %v290
  %v303 = vpack.c.bf16 %v293, %v292
  %v304 = vpack.c.bf16 %v295, %v294
  %v305 = vpack.c.bf16 %v297, %v296
  %v306 = vld [vmem:[%s2] sm:$0xff]
  %v307 = vld [vmem:[%s2 + $0x8] sm:$0xff]
  %v308 = vld [vmem:[%s2 + $0x10] sm:$0xff]
  %v309 = vld [vmem:[%s2 + $0x18] sm:$0xff]
  %v310 = vld [vmem:[%s2 + $0x20] sm:$0xff]
  %v311 = vld [vmem:[%s2 + $0x28] sm:$0xff]
  %v312 = vld [vmem:[%s2 + $0x30] sm:$0xff]
  %v313 = vld [vmem:[%s2 + $0x38] sm:$0xff]
  %v314 = vld [vmem:[%s2 + $0x40] sm:$0xff]
  %v315 = vld [vmem:[%s2 + $0x48] sm:$0xff]
  %v316 = vld [vmem:[%s2 + $0x50] sm:$0xff]
  %v317 = vld [vmem:[%s2 + $0x58] sm:$0xff]
  %v318 = vld [vmem:[%s2 + $0x60] sm:$0xff]
  %v319 = vld [vmem:[%s2 + $0x68] sm:$0xff]
  %v320 = vld [vmem:[%s2 + $0x70] sm:$0xff]
  %v321 = vld [vmem:[%s2 + $0x78] sm:$0xff]
  %v322 = vunpack.c.l.bf16 %v306
  %v323 = vunpack.c.h.bf16 %v306
  %v324 = vunpack.c.l.bf16 %v307
  %v325 = vunpack.c.h.bf16 %v307
  %v326 = vunpack.c.l.bf16 %v308
  %v327 = vunpack.c.h.bf16 %v308
  %v328 = vunpack.c.l.bf16 %v309
  %v329 = vunpack.c.h.bf16 %v309
  %v330 = vunpack.c.l.bf16 %v310
  %v331 = vunpack.c.h.bf16 %v310
  %v332 = vunpack.c.l.bf16 %v311
  %v333 = vunpack.c.h.bf16 %v311
  %v334 = vunpack.c.l.bf16 %v312
  %v335 = vunpack.c.h.bf16 %v312
  %v336 = vunpack.c.l.bf16 %v313
  %v337 = vunpack.c.h.bf16 %v313
  %v338 = vunpack.c.l.bf16 %v314
  %v339 = vunpack.c.h.bf16 %v314
  %v340 = vunpack.c.l.bf16 %v315
  %v341 = vunpack.c.h.bf16 %v315
  %v342 = vunpack.c.l.bf16 %v316
  %v343 = vunpack.c.h.bf16 %v316
  %v344 = vunpack.c.l.bf16 %v317
  %v345 = vunpack.c.h.bf16 %v317
  %v346 = vunpack.c.l.bf16 %v318
  %v347 = vunpack.c.h.bf16 %v318
  %v348 = vunpack.c.l.bf16 %v319
  %v349 = vunpack.c.h.bf16 %v319
  %v350 = vunpack.c.l.bf16 %v320
  %v351 = vunpack.c.h.bf16 %v320
  %v352 = vunpack.c.l.bf16 %v321
  %v353 = vunpack.c.h.bf16 %v321
  %v354 = vld [vmem:[%s3] sm:$0xff]
  %v355 = vld [vmem:[%s3 + $0x8] sm:$0xff]
  %v356 = vld [vmem:[%s3 + $0x10] sm:$0xff]
  %v357 = vld [vmem:[%s3 + $0x18] sm:$0xff]
  %v358 = vld [vmem:[%s3 + $0x20] sm:$0xff]
  %v359 = vld [vmem:[%s3 + $0x28] sm:$0xff]
  %v360 = vld [vmem:[%s3 + $0x30] sm:$0xff]
  %v361 = vld [vmem:[%s3 + $0x38] sm:$0xff]
  %v362 = vld [vmem:[%s3 + $0x40] sm:$0xff]
  %v363 = vld [vmem:[%s3 + $0x48] sm:$0xff]
  %v364 = vld [vmem:[%s3 + $0x50] sm:$0xff]
  %v365 = vld [vmem:[%s3 + $0x58] sm:$0xff]
  %v366 = vld [vmem:[%s3 + $0x60] sm:$0xff]
  %v367 = vld [vmem:[%s3 + $0x68] sm:$0xff]
  %v368 = vld [vmem:[%s3 + $0x70] sm:$0xff]
  %v369 = vld [vmem:[%s3 + $0x78] sm:$0xff]
  %v370 = vunpack.c.l.bf16 %v354
  %v371 = vunpack.c.h.bf16 %v354
  %v372 = vunpack.c.l.bf16 %v355
  %v373 = vunpack.c.h.bf16 %v355
  %v374 = vunpack.c.l.bf16 %v356
  %v375 = vunpack.c.h.bf16 %v356
  %v376 = vunpack.c.l.bf16 %v357
  %v377 = vunpack.c.h.bf16 %v357
  %v378 = vunpack.c.l.bf16 %v358
  %v379 = vunpack.c.h.bf16 %v358
  %v380 = vunpack.c.l.bf16 %v359
  %v381 = vunpack.c.h.bf16 %v359
  %v382 = vunpack.c.l.bf16 %v360
  %v383 = vunpack.c.h.bf16 %v360
  %v384 = vunpack.c.l.bf16 %v361
  %v385 = vunpack.c.h.bf16 %v361
  %v386 = vunpack.c.l.bf16 %v362
  %v387 = vunpack.c.h.bf16 %v362
  %v388 = vunpack.c.l.bf16 %v363
  %v389 = vunpack.c.h.bf16 %v363
  %v390 = vunpack.c.l.bf16 %v364
  %v391 = vunpack.c.h.bf16 %v364
  %v392 = vunpack.c.l.bf16 %v365
  %v393 = vunpack.c.h.bf16 %v365
  %v394 = vunpack.c.l.bf16 %v366
  %v395 = vunpack.c.h.bf16 %v366
  %v396 = vunpack.c.l.bf16 %v367
  %v397 = vunpack.c.h.bf16 %v367
  %v398 = vunpack.c.l.bf16 %v368
  %v399 = vunpack.c.h.bf16 %v368
  %v400 = vunpack.c.l.bf16 %v369
  %v401 = vunpack.c.h.bf16 %v369
  %v402 = vadd.f32 %v322, %v370
  %v403 = vadd.f32 %v323, %v371
  %v404 = vadd.f32 %v324, %v372
  %v405 = vadd.f32 %v325, %v373
  %v406 = vadd.f32 %v326, %v374
  %v407 = vadd.f32 %v327, %v375
  %v408 = vadd.f32 %v328, %v376
  %v409 = vadd.f32 %v329, %v377
  %v410 = vadd.f32 %v330, %v378
  %v411 = vadd.f32 %v331, %v379
  %v412 = vadd.f32 %v332, %v380
  %v413 = vadd.f32 %v333, %v381
  %v414 = vadd.f32 %v334, %v382
  %v415 = vadd.f32 %v335, %v383
  %v416 = vadd.f32 %v336, %v384
  %v417 = vadd.f32 %v337, %v385
  %v418 = vadd.f32 %v338, %v386
  %v419 = vadd.f32 %v339, %v387
  %v420 = vadd.f32 %v340, %v388
  %v421 = vadd.f32 %v341, %v389
  %v422 = vadd.f32 %v342, %v390
  %v423 = vadd.f32 %v343, %v391
  %v424 = vadd.f32 %v344, %v392
  %v425 = vadd.f32 %v345, %v393
  %v426 = vadd.f32 %v346, %v394
  %v427 = vadd.f32 %v347, %v395
  %v428 = vadd.f32 %v348, %v396
  %v429 = vadd.f32 %v349, %v397
  %v430 = vadd.f32 %v350, %v398
  %v431 = vadd.f32 %v351, %v399
  %v432 = vadd.f32 %v352, %v400
  %v433 = vadd.f32 %v353, %v401
  %v434 = vpack.c.bf16 %v404, %v402
  %v435 = vpack.c.bf16 %v405, %v403
  %v436 = vpack.c.bf16 %v408, %v406
  %v437 = vpack.c.bf16 %v409, %v407
  %v438 = vpack.c.bf16 %v412, %v410
  %v439 = vpack.c.bf16 %v413, %v411
  %v440 = vpack.c.bf16 %v416, %v414
  %v441 = vpack.c.bf16 %v417, %v415
  %v442 = vpack.c.bf16 %v420, %v418
  %v443 = vpack.c.bf16 %v421, %v419
  %v444 = vpack.c.bf16 %v424, %v422
  %v445 = vpack.c.bf16 %v425, %v423
  %v446 = vpack.c.bf16 %v428, %v426
  %v447 = vpack.c.bf16 %v429, %v427
  %v448 = vpack.c.bf16 %v432, %v430
  %v449 = vpack.c.bf16 %v433, %v431
  %v450 = vld [vmem:[%s6] sm:$0xf]
  %v451 = vld [vmem:[%s6 + $0x4] sm:$0xf]
  %v452 = vld [vmem:[%s6 + $0x8] sm:$0xf]
  %v453 = vld [vmem:[%s6 + $0xc] sm:$0xf]
  %v454 = vld [vmem:[%s6 + $0x10] sm:$0xf]
  %v455 = vld [vmem:[%s6 + $0x14] sm:$0xf]
  %v456 = vld [vmem:[%s7] sm:$0xf]
  %v457 = vld [vmem:[%s7 + $0x4] sm:$0xf]
  %v458 = vld [vmem:[%s7 + $0x8] sm:$0xf]
  %v459 = vld [vmem:[%s7 + $0xc] sm:$0xf]
  %v460 = vld [vmem:[%s7 + $0x10] sm:$0xf]
  %v461 = vld [vmem:[%s7 + $0x14] sm:$0xf]
  %v462 = vld [vmem:[%s7 + $0x18] sm:$0xf]
  %v463 = vld [vmem:[%s7 + $0x1c] sm:$0xf]
  %v464 = vld [vmem:[%s7 + $0x20] sm:$0xf]
  %v465 = vld [vmem:[%s7 + $0x24] sm:$0xf]
  %v466 = vld [vmem:[%s7 + $0x28] sm:$0xf]
  %v467 = vld [vmem:[%s7 + $0x2c] sm:$0xf]
  %v468 = vld [vmem:[%s7 + $0x30] sm:$0xf]
  %v469 = vld [vmem:[%s7 + $0x34] sm:$0xf]
  %v470 = vld [vmem:[%s7 + $0x38] sm:$0xf]
  %v471 = vld [vmem:[%s7 + $0x3c] sm:$0xf]
  %v472 = vld [vmem:[%s7 + $0x40] sm:$0xf]
  %v473 = vld [vmem:[%s7 + $0x44] sm:$0xf]
  %v474 = vld [vmem:[%s7 + $0x48] sm:$0xf]
  %v475 = vld [vmem:[%s7 + $0x4c] sm:$0xf]
  %v476 = vld [vmem:[%s7 + $0x50] sm:$0xf]
  %v477 = vld [vmem:[%s7 + $0x54] sm:$0xf]
  %v478 = vld [vmem:[%s7 + $0x58] sm:$0xf]
  %v479 = vld [vmem:[%s7 + $0x5c] sm:$0xf]
  %v480 = vld [vmem:[%s7 + $0x60] sm:$0xf]
  %v481 = vld [vmem:[%s7 + $0x64] sm:$0xf]
  %v482 = vld [vmem:[%s7 + $0x68] sm:$0xf]
  %v483 = vld [vmem:[%s7 + $0x6c] sm:$0xf]
  %v484 = vld [vmem:[%s7 + $0x70] sm:$0xf]
  %v485 = vld [vmem:[%s7 + $0x74] sm:$0xf]
  %v486 = vld [vmem:[%s7 + $0x78] sm:$0xf]
  %v487 = vld [vmem:[%s7 + $0x7c] sm:$0xf]
  %v520 = vunpack.c.l.b16 %v456
  %v521 = vunpack.c.l.b16 %v457
  %v522 = vunpack.c.l.b16 %v458
  %v523 = vunpack.c.l.b16 %v459
  %v524 = vunpack.c.l.b16 %v460
  %v525 = vunpack.c.l.b16 %v461
  %v526 = vunpack.c.l.b16 %v462
  %v527 = vunpack.c.l.b16 %v463
  %v528 = vunpack.c.l.b16 %v464
  %v529 = vunpack.c.l.b16 %v465
  %v530 = vunpack.c.l.b16 %v466
  %v531 = vunpack.c.l.b16 %v467
  %v532 = vunpack.c.l.b16 %v468
  %v533 = vunpack.c.l.b16 %v469
  %v534 = vunpack.c.l.b16 %v470
  %v535 = vunpack.c.l.b16 %v471
  %v536 = vunpack.c.l.b16 %v472
  %v537 = vunpack.c.l.b16 %v473
  %v538 = vunpack.c.l.b16 %v474
  %v539 = vunpack.c.l.b16 %v475
  %v540 = vunpack.c.l.b16 %v476
  %v541 = vunpack.c.l.b16 %v477
  %v542 = vunpack.c.l.b16 %v478
  %v543 = vunpack.c.l.b16 %v479
  %v544 = vunpack.c.l.b16 %v480
  %v545 = vunpack.c.l.b16 %v481
  %v546 = vunpack.c.l.b16 %v482
  %v547 = vunpack.c.l.b16 %v483
  %v548 = vunpack.c.l.b16 %v484
  %v549 = vunpack.c.l.b16 %v485
  %v550 = vunpack.c.l.b16 %v486
  %v551 = vunpack.c.l.b16 %v487
  %v552 = vpack.c.b16 %v521, %v520
  %v553 = vpack.c.b16 %v523, %v522
  %v554 = vpack.c.b16 %v525, %v524
  %v555 = vpack.c.b16 %v527, %v526
  %v556 = vpack.c.b16 %v529, %v528
  %v557 = vpack.c.b16 %v531, %v530
  %v558 = vpack.c.b16 %v533, %v532
  %v559 = vpack.c.b16 %v535, %v534
  %v560 = vpack.c.b16 %v537, %v536
  %v561 = vpack.c.b16 %v539, %v538
  %v562 = vpack.c.b16 %v541, %v540
  %v563 = vpack.c.b16 %v543, %v542
  %v564 = vpack.c.b16 %v545, %v544
  %v565 = vpack.c.b16 %v547, %v546
  %v566 = vpack.c.b16 %v549, %v548
  %v567 = vpack.c.b16 %v551, %v550
  %584 = vmatprep.subr.bf16.mxu0 0
  %585 = vmatpush1.bf16.msra.mxu0 %v559
  %586 = vmatprep.subr.bf16.mxu0 0
  %587 = vmatpush1.bf16.msra.mxu0 %v558
  %588 = vmatprep.subr.bf16.mxu0 0
  %589 = vmatpush1.bf16.msra.mxu0 %v557
  %590 = vmatprep.subr.bf16.mxu0 0
  %591 = vmatpush1.bf16.msra.mxu0 %v556
  %592 = vmatprep.subr.bf16.mxu0 0
  %593 = vmatpush1.bf16.msra.mxu0 %v555
  %594 = vmatprep.subr.bf16.mxu0 0
  %595 = vmatpush1.bf16.msra.mxu0 %v554
  %596 = vmatprep.subr.bf16.mxu0 0
  %597 = vmatpush1.bf16.msra.mxu0 %v553
  %598 = vmatprep.subr.bf16.mxu0 0
  %599 = vmatpush1.bf16.msra.mxu0 %v552
  %600 = vmatprep.subr.bf16.mxu0 0
  %601 = vmatpush2.bf16.msra.mxu0 %v567
  %602 = vmatprep.subr.bf16.mxu0 0
  %603 = vmatpush2.bf16.msra.mxu0 %v566
  %604 = vmatprep.subr.bf16.mxu0 0
  %605 = vmatpush2.bf16.msra.mxu0 %v565
  %606 = vmatprep.subr.bf16.mxu0 0
  %607 = vmatpush2.bf16.msra.mxu0 %v564
  %608 = vmatprep.subr.bf16.mxu0 0
  %609 = vmatpush2.bf16.msra.mxu0 %v563
  %610 = vmatprep.subr.bf16.mxu0 0
  %611 = vmatpush2.bf16.msra.mxu0 %v562
  %612 = vmatprep.subr.bf16.mxu0 0
  %613 = vmatpush2.bf16.msra.mxu0 %v561
  %614 = vmatprep.subr.bf16.mxu0 0
  %615 = vmatpush2.bf16.msra.mxu0 %v560
  %616 = vmatprep.mubr.bf16.mxu0 %v435
  %617 = vmatmul.mubr.bf16.gmra.mxu0 %v434
  %v618 = vpop.f32.mrf.mxu0
  %v619 = vadd.f32 0.0, %v618
  %v620 = vpop.f32.mrf.mxu0
  %v621 = vpop.f32.mrf.mxu0
  %v622 = vadd.f32 0.0, %v621
  %v623 = vpop.f32.mrf.mxu0
  %624 = vmatprep.mubr.bf16.mxu0 %v437
  %625 = vmatmul.mubr.bf16.gmra.mxu0 %v436
  %v626 = vpop.f32.mrf.mxu0
  %v627 = vadd.f32 0.0, %v626
  %v628 = vpop.f32.mrf.mxu0
  %v629 = vpop.f32.mrf.mxu0
  %v630 = vadd.f32 0.0, %v629
  %v631 = vpop.f32.mrf.mxu0
  %632 = vmatprep.mubr.bf16.mxu0 %v439
  %633 = vmatmul.mubr.bf16.gmra.mxu0 %v438
  %v634 = vpop.f32.mrf.mxu0
  %v635 = vadd.f32 0.0, %v634
  %v636 = vpop.f32.mrf.mxu0
  %v637 = vpop.f32.mrf.mxu0
  %v638 = vadd.f32 0.0, %v637
  %v639 = vpop.f32.mrf.mxu0
  %640 = vmatprep.mubr.bf16.mxu0 %v441
  %641 = vmatmul.mubr.bf16.gmra.mxu0 %v440
  %v642 = vpop.f32.mrf.mxu0
  %v643 = vadd.f32 0.0, %v642
  %v644 = vpop.f32.mrf.mxu0
  %v645 = vpop.f32.mrf.mxu0
  %v646 = vadd.f32 0.0, %v645
  %v647 = vpop.f32.mrf.mxu0
  %648 = vmatprep.mubr.bf16.mxu0 %v443
  %649 = vmatmul.mubr.bf16.gmra.mxu0 %v442
  %v650 = vpop.f32.mrf.mxu0
  %v651 = vadd.f32 0.0, %v650
  %v652 = vpop.f32.mrf.mxu0
  %v653 = vpop.f32.mrf.mxu0
  %v654 = vadd.f32 0.0, %v653
  %v655 = vpop.f32.mrf.mxu0
  %656 = vmatprep.mubr.bf16.mxu0 %v445
  %657 = vmatmul.mubr.bf16.gmra.mxu0 %v444
  %v658 = vpop.f32.mrf.mxu0
  %v659 = vadd.f32 0.0, %v658
  %v660 = vpop.f32.mrf.mxu0
  %v661 = vpop.f32.mrf.mxu0
  %v662 = vadd.f32 0.0, %v661
  %v663 = vpop.f32.mrf.mxu0
  %664 = vmatprep.mubr.bf16.mxu0 %v447
  %665 = vmatmul.mubr.bf16.gmra.mxu0 %v446
  %v666 = vpop.f32.mrf.mxu0
  %v667 = vadd.f32 0.0, %v666
  %v668 = vpop.f32.mrf.mxu0
  %v669 = vpop.f32.mrf.mxu0
  %v670 = vadd.f32 0.0, %v669
  %v671 = vpop.f32.mrf.mxu0
  %672 = vmatprep.mubr.bf16.mxu0 %v449
  %673 = vmatmul.mubr.bf16.gmra.mxu0 %v448
  %v674 = vpop.f32.mrf.mxu0
  %v675 = vadd.f32 0.0, %v674
  %v676 = vpop.f32.mrf.mxu0
  %v677 = vpop.f32.mrf.mxu0
  %v678 = vadd.f32 0.0, %v677
  %v679 = vpop.f32.mrf.mxu0
  %680 = vdwg.mxu0
  %v687 = vunpack.c.l.b16 %v450
  %v688 = vunpack.c.l.b16 %v451
  %v689 = vunpack.c.l.b16 %v452
  %v690 = vunpack.c.l.b16 %v453
  %v691 = vunpack.c.l.b16 %v454
  %v692 = vunpack.c.l.b16 %v455
  %v693 = vpack.c.b16 %v688, %v687
  %v694 = vpack.c.b16 %v690, %v689
  %v695 = vpack.c.b16 %v692, %v691
  %vm699 = vcmask 392192
  %v701 = vsel %vm699, %v298, 0
  %v704 = vsel %vm699, %v299, 0
  %v707 = vsel %vm699, %v300, 0
  %v710 = vsel %vm699, %v301, 0
  %v713 = vsel %vm699, %v302, 0
  %v716 = vsel %vm699, %v303, 0
  %v719 = vsel %vm699, %v304, 0
  %v722 = vsel %vm699, %v305, 0
  %724 = vmatprep.subr.bf16.mxu0 0
  %725 = vmatpush1.bf16.msra.mxu0 0
  %726 = vmatprep.subr.bf16.mxu0 0
  %727 = vmatpush1.bf16.msra.mxu0 0
  %728 = vmatprep.subr.bf16.mxu0 0
  %729 = vmatpush1.bf16.msra.mxu0 0
  %730 = vmatprep.subr.bf16.mxu0 0
  %731 = vmatpush1.bf16.msra.mxu0 0
  %732 = vmatprep.subr.bf16.mxu0 0
  %733 = vmatpush1.bf16.msra.mxu0 0
  %734 = vmatprep.subr.bf16.mxu0 0
  %735 = vmatpush1.bf16.msra.mxu0 %v695
  %736 = vmatprep.subr.bf16.mxu0 0
  %737 = vmatpush1.bf16.msra.mxu0 %v694
  %738 = vmatprep.subr.bf16.mxu0 0
  %739 = vmatpush1.bf16.msra.mxu0 %v693
  %740 = vmatprep.subr.bf16.mxu0 0
  %741 = vmatpush2.bf16.msra.mxu0 0
  %742 = vmatprep.subr.bf16.mxu0 0
  %743 = vmatpush2.bf16.msra.mxu0 0
  %744 = vmatprep.subr.bf16.mxu0 0
  %745 = vmatpush2.bf16.msra.mxu0 0
  %746 = vmatprep.subr.bf16.mxu0 0
  %747 = vmatpush2.bf16.msra.mxu0 0
  %748 = vmatprep.subr.bf16.mxu0 0
  %749 = vmatpush2.bf16.msra.mxu0 0
  %750 = vmatprep.subr.bf16.mxu0 0
  %751 = vmatpush2.bf16.msra.mxu0 0
  %752 = vmatprep.subr.bf16.mxu0 0
  %753 = vmatpush2.bf16.msra.mxu0 0
  %754 = vmatprep.subr.bf16.mxu0 0
  %755 = vmatpush2.bf16.msra.mxu0 0
  %756 = vmatprep.mubr.bf16.mxu0 0
  %757 = vmatmul.mubr.bf16.gmra.mxu0 %v701
  %v758 = vpop.f32.mrf.mxu0
  %v759 = vadd.f32 %v619, %v758
  %v760 = vpop.f32.mrf.mxu0
  %v761 = vpop.f32.mrf.mxu0
  %v762 = vadd.f32 %v622, %v761
  %v763 = vpop.f32.mrf.mxu0
  %764 = vmatprep.mubr.bf16.mxu0 0
  %765 = vmatmul.mubr.bf16.gmra.mxu0 %v704
  %v766 = vpop.f32.mrf.mxu0
  %v767 = vadd.f32 %v627, %v766
  %v768 = vpop.f32.mrf.mxu0
  %v769 = vpop.f32.mrf.mxu0
  %v770 = vadd.f32 %v630, %v769
  %v771 = vpop.f32.mrf.mxu0
  %772 = vmatprep.mubr.bf16.mxu0 0
  %773 = vmatmul.mubr.bf16.gmra.mxu0 %v707
  %v774 = vpop.f32.mrf.mxu0
  %v775 = vadd.f32 %v635, %v774
  %v776 = vpop.f32.mrf.mxu0
  %v777 = vpop.f32.mrf.mxu0
  %v778 = vadd.f32 %v638, %v777
  %v779 = vpop.f32.mrf.mxu0
  %780 = vmatprep.mubr.bf16.mxu0 0
  %781 = vmatmul.mubr.bf16.gmra.mxu0 %v710
  %v782 = vpop.f32.mrf.mxu0
  %v783 = vadd.f32 %v643, %v782
  %v784 = vpop.f32.mrf.mxu0
  %v785 = vpop.f32.mrf.mxu0
  %v786 = vadd.f32 %v646, %v785
  %v787 = vpop.f32.mrf.mxu0
  %788 = vmatprep.mubr.bf16.mxu0 0
  %789 = vmatmul.mubr.bf16.gmra.mxu0 %v713
  %v790 = vpop.f32.mrf.mxu0
  %v791 = vadd.f32 %v651, %v790
  %v792 = vpop.f32.mrf.mxu0
  %v793 = vpop.f32.mrf.mxu0
  %v794 = vadd.f32 %v654, %v793
  %v795 = vpop.f32.mrf.mxu0
  %796 = vmatprep.mubr.bf16.mxu0 0
  %797 = vmatmul.mubr.bf16.gmra.mxu0 %v716
  %v798 = vpop.f32.mrf.mxu0
  %v799 = vadd.f32 %v659, %v798
  %v800 = vpop.f32.mrf.mxu0
  %v801 = vpop.f32.mrf.mxu0
  %v802 = vadd.f32 %v662, %v801
  %v803 = vpop.f32.mrf.mxu0
  %804 = vmatprep.mubr.bf16.mxu0 0
  %805 = vmatmul.mubr.bf16.gmra.mxu0 %v719
  %v806 = vpop.f32.mrf.mxu0
  %v807 = vadd.f32 %v667, %v806
  %v808 = vpop.f32.mrf.mxu0
  %v809 = vpop.f32.mrf.mxu0
  %v810 = vadd.f32 %v670, %v809
  %v811 = vpop.f32.mrf.mxu0
  %812 = vmatprep.mubr.bf16.mxu0 0
  %813 = vmatmul.mubr.bf16.gmra.mxu0 %v722
  %v814 = vpop.f32.mrf.mxu0
  %v815 = vadd.f32 %v675, %v814
  %v816 = vpop.f32.mrf.mxu0
  %v817 = vpop.f32.mrf.mxu0
  %v818 = vadd.f32 %v678, %v817
  %v819 = vpop.f32.mrf.mxu0
  %820 = vdwg.mxu0
  %v821 = vld [vmem:[%s8] sm:$0x1]
  %v823 = vlaneseq
  %v824 = vshrl.u32 %v823, 7
  %v825 = vsub.s32 0, %v824
  %v826 = vrot.slane %v821, %v825
  %v828 = vadd.f32 %v759, %v826
  %v829 = vadd.f32 %v762, %v826
  %v830 = vadd.f32 %v767, %v826
  %v831 = vadd.f32 %v770, %v826
  %v832 = vadd.f32 %v775, %v826
  %v833 = vadd.f32 %v778, %v826
  %v834 = vadd.f32 %v783, %v826
  %v835 = vadd.f32 %v786, %v826
  %v836 = vadd.f32 %v791, %v826
  %v837 = vadd.f32 %v794, %v826
  %v838 = vadd.f32 %v799, %v826
  %v839 = vadd.f32 %v802, %v826
  %v840 = vadd.f32 %v807, %v826
  %v841 = vadd.f32 %v810, %v826
  %v842 = vadd.f32 %v815, %v826
  %v843 = vadd.f32 %v818, %v826
  %v844 = vpack.c.bf16 %v829, %v828
  %v845 = vpack.c.bf16 %v831, %v830
  %v846 = vpack.c.bf16 %v833, %v832
  %v847 = vpack.c.bf16 %v835, %v834
  %v848 = vpack.c.bf16 %v837, %v836
  %v849 = vpack.c.bf16 %v839, %v838
  %v850 = vpack.c.bf16 %v841, %v840
  %v851 = vpack.c.bf16 %v843, %v842
  %v860 = vunpack.c.l.b16 %v844
  %v861 = vunpack.c.h.b16 %v844
  %v862 = vunpack.c.l.b16 %v845
  %v863 = vunpack.c.h.b16 %v845
  %v864 = vunpack.c.l.b16 %v846
  %v865 = vunpack.c.h.b16 %v846
  %v866 = vunpack.c.l.b16 %v847
  %v867 = vunpack.c.h.b16 %v847
  %v868 = vunpack.c.l.b16 %v848
  %v869 = vunpack.c.h.b16 %v848
  %v870 = vunpack.c.l.b16 %v849
  %v871 = vunpack.c.h.b16 %v849
  %v872 = vunpack.c.l.b16 %v850
  %v873 = vunpack.c.h.b16 %v850
  %v874 = vunpack.c.l.b16 %v851
  %v875 = vunpack.c.h.b16 %v851
  %v876 = vpack.c.b16 %v860, %v860
  %v877 = vpack.c.b16 %v861, %v861
  %v878 = vpack.c.b16 %v862, %v862
  %v879 = vpack.c.b16 %v863, %v863
  %v880 = vpack.c.b16 %v864, %v864
  %v881 = vpack.c.b16 %v865, %v865
  %v882 = vpack.c.b16 %v866, %v866
  %v883 = vpack.c.b16 %v867, %v867
  %v884 = vpack.c.b16 %v868, %v868
  %v885 = vpack.c.b16 %v869, %v869
  %v886 = vpack.c.b16 %v870, %v870
  %v887 = vpack.c.b16 %v871, %v871
  %v888 = vpack.c.b16 %v872, %v872
  %v889 = vpack.c.b16 %v873, %v873
  %v890 = vpack.c.b16 %v874, %v874
  %v891 = vpack.c.b16 %v875, %v875
  %908 = vst [vmem:[%s9] sm:$0xf] %v876
  %909 = vst [vmem:[%s9 + $0x4] sm:$0xf] %v877
  %910 = vst [vmem:[%s9 + $0x8] sm:$0xf] %v878
  %911 = vst [vmem:[%s9 + $0xc] sm:$0xf] %v879
  %912 = vst [vmem:[%s9 + $0x10] sm:$0xf] %v880
  %913 = vst [vmem:[%s9 + $0x14] sm:$0xf] %v881
  %914 = vst [vmem:[%s9 + $0x18] sm:$0xf] %v882
  %915 = vst [vmem:[%s9 + $0x1c] sm:$0xf] %v883
  %916 = vst [vmem:[%s9 + $0x20] sm:$0xf] %v884
  %917 = vst [vmem:[%s9 + $0x24] sm:$0xf] %v885
  %918 = vst [vmem:[%s9 + $0x28] sm:$0xf] %v886
  %919 = vst [vmem:[%s9 + $0x2c] sm:$0xf] %v887
  %920 = vst [vmem:[%s9 + $0x30] sm:$0xf] %v888
  %921 = vst [vmem:[%s9 + $0x34] sm:$0xf] %v889
  %922 = vst [vmem:[%s9 + $0x38] sm:$0xf] %v890
  %923 = vst [vmem:[%s9 + $0x3c] sm:$0xf] %v891
  // Predicated region
  $region38: #{rain_forward.3} parent=0 // pred_check
    _
  $region39: #{rain_forward.3} parent=0 // pred_check_branch
    %925 = sbr.rel (0) target = $region41
  $region40: #{rain_forward.3} parent=0 // pred_region
    _
  $region41: #{rain_forward.3} parent=0 // pred_fallthru
    _
  // Predicated region
  $region42: #{rain_forward.3} parent=0 // pred_check
    _
  $region43: #{rain_forward.3} parent=0 // pred_check_branch
    %927 = sbr.rel (0) target = $region45
  $region44: #{rain_forward.3} parent=0 // pred_region
    _
  $region45: #{rain_forward.3} parent=0 // pred_fallthru
    _

</llo_original>
